<compile_context>
chip_gen: v6e
topology: v6e:2x2x1
jax: 0.10.0
libtpu: 0.0.40
codegen_flags: <defaults>
</compile_context>

<pallas_src>
import functools

import jax
import jax.numpy as jnp
from jax.experimental import pallas as pl
from jax.experimental.pallas import tpu as pltpu

_BN_EPS = 1e-5


def _vmem_capacity_bytes():
    try:
        cap = getattr(pltpu.get_tpu_info(), "vmem_capacity_bytes", None)
        if cap:
            return int(cap)
    except Exception:
        pass
    return 64 * 1024 * 1024  # conservative default (v7x per-TC VMEM)


def _pick_t_hw(hw, cin, cout, compute_bytes, out_bytes, budget, requested=None):
    """Spatial (lane) tile: a multiple of 128 (or the full H*W), sized for VMEM."""
    if requested is not None:
        return min(int(requested), hw)
    if hw <= 128:
        return hw
    per_lane = (3 * cin * 4            # x blocks (f32 in HBM, Buffered(3) in phase 2)
                + 2 * cout * out_bytes  # double-buffered output block
                + 3 * cout * 4)         # f32 matmul / activation intermediates
    fixed = 2 * cout * cin * compute_bytes + 2 * cin * cin * 4 + (1 << 20)
    t = max(128, (budget - fixed) // max(per_lane, 1))
    t = min(t, 8 * 1024, hw)
    t -= t % 128
    t = max(t, 128)
    if hw % 128 == 0:
        # Largest multiple of 128 that divides hw and fits: no tail masking needed.
        best, d = 128, 128
        while d <= t:
            if hw % d == 0:
                best = d
            d += 128
        t = best
    elif t >= hw:
        t = hw
    return t


def _stats_kernel(x_ref, gram_ref, rsum_ref, *, hw, t_hw, compute_dtype):
    """Accumulate rowsum(x) and the Gram matrix x @ x^T over all N*H*W positions."""
    b = pl.program_id(1)
    h = pl.program_id(2)

    @pl.when((b == 0) & (h == 0))
    def _():
        gram_ref[...] = jnp.zeros_like(gram_ref)
        rsum_ref[...] = jnp.zeros_like(rsum_ref)

    x = x_ref[...]                                   # (Cin, t_hw) f32
    if hw % t_hw != 0:                               # static: mask tail lanes only if needed
        col = jax.lax.broadcasted_iota(jnp.int32, (1, t_hw), 1) + h * t_hw
        x = jnp.where(col < hw, x, 0.0)
    xc = x.astype(compute_dtype)
    gram_ref[...] += jnp.einsum("ct,dt->cd", xc, xc,
                                preferred_element_type=jnp.float32)
    rsum_ref[...] += jnp.sum(xc.astype(jnp.float32), axis=1, keepdims=True)


def _norm_silu_kernel(x_ref, w_ref, shift_ref, o_ref, *, compute_dtype):
    """1x1 conv with BN-scale-folded weights, add BN shift, then SiLU."""
    x = x_ref[0].astype(compute_dtype)               # (Cin, t_hw)
    z = jnp.dot(w_ref[...], x, preferred_element_type=jnp.float32)  # (Cout, t_hw)
    z = z + shift_ref[...]                           # BN shift (scale already in weights)
    sig = 1.0 / (1.0 + jnp.exp(-z))                  # exact sigmoid (exp on EUP)
    o_ref[...] = (z * sig).astype(o_ref.dtype)


def conv_bn_silu(x, w, gamma, beta, *, t_hw=None, compute_dtype=jnp.bfloat16,
                 out_dtype=None):
    """ConvBNSiLU forward (1x1 conv, stride 1, padding 0, groups 1, bias=False).

    x: (N, Cin, H, W); w: (Cout, Cin, 1, 1); gamma/beta: (Cout,).
    Returns (N, Cout, H, W) with training-mode BatchNorm semantics.
    """
    N, Cin, H, W = x.shape
    Cout = w.shape[0]
    HW = H * W
    M = N * HW
    out_dtype = x.dtype if out_dtype is None else out_dtype

    compute_bytes = jnp.dtype(compute_dtype).itemsize
    out_bytes = jnp.dtype(out_dtype).itemsize
    vmem_cap = _vmem_capacity_bytes()
    budget = int(vmem_cap * 0.45)
    t_hw = _pick_t_hw(HW, Cin, Cout, compute_bytes, out_bytes, budget, t_hw)
    n_hw = pl.cdiv(HW, t_hw)
    vmem_limit = min(max(int(vmem_cap * 0.7), 32 * 1024 * 1024), 112 * 1024 * 1024)

    # NCHW-direct views (free reshapes; no activation copies in the wrapper).
    x3 = x.reshape(N, Cin, HW)
    w2 = w.reshape(Cout, Cin).astype(jnp.float32)
    w_c = w2.astype(compute_dtype)

    # ---- phase 1: per-channel rowsum(x) and Gram(x) over all positions ----
    n_split = 2 if (N % 2 == 0 and N >= 2) else 1   # 2 TCs on v7x; harmless on 1-TC chips
    n_per_split = N // n_split
    stats_kernel = functools.partial(_stats_kernel, hw=HW, t_hw=t_hw,
                                     compute_dtype=compute_dtype)
    gram_parts, rsum_parts = pl.pallas_call(
        stats_kernel,
        out_shape=(jax.ShapeDtypeStruct((n_split, Cin, Cin), jnp.float32),
                   jax.ShapeDtypeStruct((n_split, Cin, 1), jnp.float32)),
        grid_spec=pltpu.PrefetchScalarGridSpec(
            num_scalar_prefetch=0,
            grid=(n_split, n_per_split, n_hw),
            in_specs=[
                pl.BlockSpec((None, Cin, t_hw),
                             lambda s, b, h: (s * n_per_split + b, 0, h)),
            ],
            out_specs=[
                pl.BlockSpec((None, Cin, Cin), lambda s, b, h: (s, 0, 0)),
                pl.BlockSpec((None, Cin, 1), lambda s, b, h: (s, 0, 0)),
            ],
        ),
        compiler_params=pltpu.CompilerParams(
            dimension_semantics=("parallel", "arbitrary", "arbitrary"),
            vmem_limit_bytes=vmem_limit),
    )(x3)

    # ---- tiny JAX finalize: BN fold (scale into weights, shift separate) ----
    gram = jnp.sum(gram_parts, axis=0)               # (Cin, Cin)
    rsum = jnp.sum(rsum_parts, axis=0)[:, 0]         # (Cin,)
    wf = w_c.astype(jnp.float32)                     # weights as phase-2 sees them
    sum_y = wf @ rsum                                # (Cout,)
    sumsq_y = jnp.sum((wf @ gram) * wf, axis=1)      # diag(W G W^T)
    mean = sum_y / M
    var = jnp.maximum(sumsq_y / M - mean * mean, 0.0)
    scale = gamma.astype(jnp.float32) * jax.lax.rsqrt(var + _BN_EPS)
    shift = (beta.astype(jnp.float32) - mean * scale).reshape(Cout, 1)
    w_scaled = (w2 * scale[:, None]).astype(compute_dtype)

    # ---- phase 2: conv (scaled weights) + shift + SiLU, lane-dense NCHW output ----
    norm_kernel = functools.partial(_norm_silu_kernel, compute_dtype=compute_dtype)
    out3 = pl.pallas_call(
        norm_kernel,
        out_shape=jax.ShapeDtypeStruct((N, Cout, HW), out_dtype),
        grid_spec=pltpu.PrefetchScalarGridSpec(
            num_scalar_prefetch=0,
            grid=(N, n_hw),
            in_specs=[
                pl.BlockSpec((1, Cin, t_hw), lambda n, h: (n, 0, h),
                             pipeline_mode=pl.Buffered(3)),
                pl.BlockSpec((Cout, Cin), lambda n, h: (0, 0)),   # resident scaled weights
                pl.BlockSpec((Cout, 1), lambda n, h: (0, 0)),     # resident shift
            ],
            out_specs=pl.BlockSpec((None, Cout, t_hw), lambda n, h: (n, 0, h)),
        ),
        compiler_params=pltpu.CompilerParams(
            dimension_semantics=("parallel", "parallel"),
            vmem_limit_bytes=vmem_limit),
    )(x3, w_scaled, shift)

    return out3.reshape(N, Cout, H, W)


def _reference(x, w, gamma, beta):
    """Pure-JAX reference of the PyTorch forward (train-mode BN)."""
    Cout = w.shape[0]
    Cin = x.shape[1]
    y = jnp.einsum("nchw,oc->nohw", x, w.reshape(Cout, Cin))
    mean = jnp.mean(y, axis=(0, 2, 3), keepdims=True)
    var = jnp.mean((y - mean) ** 2, axis=(0, 2, 3), keepdims=True)
    y_hat = (y - mean) * jax.lax.rsqrt(var + _BN_EPS)
    y_bn = y_hat * gamma.reshape(1, Cout, 1, 1) + beta.reshape(1, Cout, 1, 1)
    return y_bn * jax.nn.sigmoid(y_bn)


if __name__ == "__main__":
    key = jax.random.PRNGKey(0)
    k_x, k_w, k_g, k_b = jax.random.split(key, 4)

    N, Cin, Cout, H, W = 2, 4, 8, 16, 16
    x = jax.random.normal(k_x, (N, Cin, H, W), dtype=jnp.float32)
    w = jax.random.normal(k_w, (Cout, Cin, 1, 1), dtype=jnp.float32) * 0.1
    gamma = 1.0 + 0.1 * jax.random.normal(k_g, (Cout,), dtype=jnp.float32)
    beta = 0.1 * jax.random.normal(k_b, (Cout,), dtype=jnp.float32)

    ref = _reference(x, w, gamma, beta)

    # f32 compute path, auto tile (t_hw = H*W = 256, single spatial tile per batch).
    out_f32 = jax.block_until_ready(
        conv_bn_silu(x, w, gamma, beta, compute_dtype=jnp.float32))
    assert out_f32.shape == (N, Cout, H, W)
    assert out_f32.dtype == jnp.float32
    assert jnp.allclose(out_f32, ref, atol=1e-2, rtol=1e-2)

    # bf16 compute path with forced spatial tiling (t_hw=128 -> 2 tiles per batch),
    # exercising multi-step Gram accumulation and the 2-way phase-1 split.
    out_bf16 = jax.block_until_ready(
        conv_bn_silu(x, w, gamma, beta, t_hw=128, compute_dtype=jnp.bfloat16))
    assert out_bf16.shape == (N, Cout, H, W)
    assert jnp.allclose(out_bf16, ref, atol=8e-2, rtol=8e-2)

    print("KERNEL_OK")
</pallas_src>

<mosaic_0001>
module attributes {stable_mosaic.version = 11 : i64} {
  func.func @_stats_kernel(%arg0: i32, %arg1: i32, %arg2: i32, %arg3: memref<1x4x256xf32, #tpu.memory_space<vmem>>, %arg4: memref<1x4x4xf32, #tpu.memory_space<vmem>>, %arg5: memref<1x4x1xf32, #tpu.memory_space<vmem>>) attributes {dimension_semantics = [#tpu.dimension_semantics<parallel>, #tpu.dimension_semantics<arbitrary>, #tpu.dimension_semantics<arbitrary>], iteration_bounds = array<i64: 2, 1, 1>, scalar_prefetch = 0 : i64, scratch_operands = 0 : i64, tpu.core_type = #tpu.core_type<tc>, window_params = [{transform_indices = @transform_0, window_bounds = array<i64: 1, 4, 256>}, {transform_indices = @transform_1, window_bounds = array<i64: 1, 4, 4>}, {transform_indices = @transform_2, window_bounds = array<i64: 1, 4, 1>}]} {
    %c0_i32 = arith.constant 0 : i32
    %0 = arith.cmpi eq, %arg1, %c0_i32 : i32
    %c0_i32_0 = arith.constant 0 : i32
    %1 = arith.cmpi eq, %arg2, %c0_i32_0 : i32
    %2 = arith.andi %0, %1 : i1
    %3 = arith.extui %2 : i1 to i32
    %c0_i32_1 = arith.constant 0 : i32
    %4 = arith.cmpi ne, %3, %c0_i32_1 : i32
    scf.if %4 {
      %cst_17 = arith.constant 0.000000e+00 : f32
      %22 = vector.broadcast %cst_17 : f32 to vector<4x4xf32>
      %c0_18 = arith.constant 0 : index
      %c0_19 = arith.constant 0 : index
      %c0_20 = arith.constant 0 : index
      %23 = vector.load %arg4[%c0_18, %c0_19, %c0_20] : memref<1x4x4xf32, #tpu.memory_space<vmem>>, vector<1x4x4xf32>
      %24 = vector.shape_cast %23 : vector<1x4x4xf32> to vector<4x4xf32>
      %25 = vector.shape_cast %22 : vector<4x4xf32> to vector<1x4x4xf32>
      tpu.vector_store %arg4[%c0_18, %c0_19, %c0_20], %25 {strides = array<i32>} : memref<1x4x4xf32, #tpu.memory_space<vmem>>, vector<1x4x4xf32>,
      %cst_21 = arith.constant 0.000000e+00 : f32
      %26 = vector.broadcast %cst_21 : f32 to vector<4x1xf32>
      %c0_22 = arith.constant 0 : index
      %c0_23 = arith.constant 0 : index
      %c0_24 = arith.constant 0 : index
      %27 = vector.load %arg5[%c0_22, %c0_23, %c0_24] : memref<1x4x1xf32, #tpu.memory_space<vmem>>, vector<1x4x1xf32>
      %28 = vector.shape_cast %27 : vector<1x4x1xf32> to vector<4x1xf32>
      %29 = vector.shape_cast %26 : vector<4x1xf32> to vector<1x4x1xf32>
      tpu.vector_store %arg5[%c0_22, %c0_23, %c0_24], %29 {strides = array<i32>} : memref<1x4x1xf32, #tpu.memory_space<vmem>>, vector<1x4x1xf32>,
    } else {
    }
    %c0 = arith.constant 0 : index
    %c0_2 = arith.constant 0 : index
    %c0_3 = arith.constant 0 : index
    %5 = vector.load %arg3[%c0, %c0_2, %c0_3] : memref<1x4x256xf32, #tpu.memory_space<vmem>>, vector<1x4x256xf32>
    %6 = vector.shape_cast %5 : vector<1x4x256xf32> to vector<4x256xf32>
    %c0_4 = arith.constant 0 : index
    %c0_5 = arith.constant 0 : index
    %c0_6 = arith.constant 0 : index
    %7 = vector.load %arg4[%c0_4, %c0_5, %c0_6] : memref<1x4x4xf32, #tpu.memory_space<vmem>>, vector<1x4x4xf32>
    %8 = vector.shape_cast %7 : vector<1x4x4xf32> to vector<4x4xf32>
    "tpu.trace_start"() <{level = 10 : i32, message = "ct,dt->cd"}> : () -> ()
    %cst = arith.constant dense<0.000000e+00> : vector<4x4xf32>
    %9 = tpu.matmul %6, %6, %cst {dimension_numbers = #tpu.dot_dimension_numbers<[1], [1], [0], [0], [0, 0, 1, 0], [], []>} : vector<4x256xf32>, vector<4x256xf32>, vector<4x4xf32> -> vector<4x4xf32>
    "tpu.trace_stop"() : () -> ()
    %10 = arith.addf %8, %9 : vector<4x4xf32>
    %c0_7 = arith.constant 0 : index
    %c0_8 = arith.constant 0 : index
    %c0_9 = arith.constant 0 : index
    %11 = vector.load %arg4[%c0_7, %c0_8, %c0_9] : memref<1x4x4xf32, #tpu.memory_space<vmem>>, vector<1x4x4xf32>
    %12 = vector.shape_cast %11 : vector<1x4x4xf32> to vector<4x4xf32>
    %13 = vector.shape_cast %10 : vector<4x4xf32> to vector<1x4x4xf32>
    tpu.vector_store %arg4[%c0_7, %c0_8, %c0_9], %13 {strides = array<i32>} : memref<1x4x4xf32, #tpu.memory_space<vmem>>, vector<1x4x4xf32>,
    %c0_10 = arith.constant 0 : index
    %c0_11 = arith.constant 0 : index
    %c0_12 = arith.constant 0 : index
    %14 = vector.load %arg5[%c0_10, %c0_11, %c0_12] : memref<1x4x1xf32, #tpu.memory_space<vmem>>, vector<1x4x1xf32>
    %15 = vector.shape_cast %14 : vector<1x4x1xf32> to vector<4x1xf32>
    %cst_13 = arith.constant dense<0.000000e+00> : vector<4xf32>
    %16 = vector.multi_reduction <add>, %6, %cst_13 [1] : vector<4x256xf32> to vector<4xf32>
    %17 = vector.shape_cast %16 : vector<4xf32> to vector<4x1xf32>
    %18 = arith.addf %15, %17 : vector<4x1xf32>
    %c0_14 = arith.constant 0 : index
    %c0_15 = arith.constant 0 : index
    %c0_16 = arith.constant 0 : index
    %19 = vector.load %arg5[%c0_14, %c0_15, %c0_16] : memref<1x4x1xf32, #tpu.memory_space<vmem>>, vector<1x4x1xf32>
    %20 = vector.shape_cast %19 : vector<1x4x1xf32> to vector<4x1xf32>
    %21 = vector.shape_cast %18 : vector<4x1xf32> to vector<1x4x1xf32>
    tpu.vector_store %arg5[%c0_14, %c0_15, %c0_16], %21 {strides = array<i32>} : memref<1x4x1xf32, #tpu.memory_space<vmem>>, vector<1x4x1xf32>,
    return
  }
  func.func @transform_0(%arg0: i32, %arg1: i32, %arg2: i32) -> (i32, i32, i32) {
    %c1_i32 = arith.constant 1 : i32
    %0 = arith.muli %arg0, %c1_i32 : i32
    %1 = arith.addi %0, %arg1 : i32
    %c0_i32 = arith.constant 0 : i32
    %c0_i32_0 = arith.constant 0 : i32
    return %1, %c0_i32, %arg2 : i32, i32, i32
  }
  func.func @transform_1(%arg0: i32, %arg1: i32, %arg2: i32) -> (i32, i32, i32) {
    %c0_i32 = arith.constant 0 : i32
    %c0_i32_0 = arith.constant 0 : i32
    %c0_i32_1 = arith.constant 0 : i32
    return %arg0, %c0_i32, %c0_i32_0 : i32, i32, i32
  }
  func.func @transform_2(%arg0: i32, %arg1: i32, %arg2: i32) -> (i32, i32, i32) {
    %c0_i32 = arith.constant 0 : i32
    %c0_i32_0 = arith.constant 0 : i32
    %c0_i32_1 = arith.constant 0 : i32
    return %arg0, %c0_i32, %c0_i32_0 : i32, i32, i32
  }
}

</mosaic_0001>

<llo_original>
// kernel: tpu_custom_call.1
$region0: #{tpu_custom_call.1}
  #allocation0 [shape = 'u32[]', space=smem, size = 0x4, offset = 0x4, fixed_abs, tag = 'smem constant byte address 0x4 - core index']
  #allocation1 [shape = 'u32[144,128]{1,0:T(1,128)}', space=vmem, size = 0x12000, scoped, tag = 'internal scratch']
  %s0 = inlined_call_operand.hbm [shape: f32[2,4,256], index: 0, kind: input, shape index: {}]
  %s1 = inlined_call_operand.hbm [shape: f32[2,4,4], index: 1, kind: output, shape index: {0}]
  %s2 = inlined_call_operand.vmem [shape: f32[2,4,1], index: 2, kind: output, shape index: {1}]
  %3 = xla_tuple %s1, %s2
  %s4 = sld [smem:[#allocation0]]
  $region53: #{tpu_custom_call.1} parent=0
    _
  %s6 = ssub.s32 1, %s4
  %s7 = scalar_select 0, %s6, %s4
  $region1: #{tpu_custom_call.1} parent=0
    #allocation2 [shape = 'u8[8192]{0}', space=vmem, size = 0x2000, scoped, tag = 'input window, operand 0']
    #allocation3 [shape = 's32[2]{0}', space=sflag, size = 0x8, scoped, tag = 'scoped memory for tpu_custom_call.1']
    #allocation4 [shape = 's32[2]{0}', space=sflag, size = 0x8, scoped, tag = 'scoped memory for tpu_custom_call.1']
    #allocation5 [shape = 'u8[4096]{0}', space=vmem, size = 0x1000, scoped, tag = 'output window, operand 0']
    %8 = vsyncpa [#allocation3], 0
    %s9 = scalar_lea.sflag [#allocation3], 1
    %10 = vsyncpa %s9, 0
    %11 = vsyncpa [#allocation4], 0
    %s12 = scalar_lea.sflag [#allocation4], 1
    %13 = vsyncpa %s12, 0
    loop: start=0, step=1, limit=4
    $region2: #{tpu_custom_call.1} parent=1 // loop_pre_header
      _
    $region3: #{tpu_custom_call.1} parent=1 // loop_header
      %s15 = sphi 0, %s19
      %p16 = scmp.ge.s32.totalorder %s15, 4
      %s22 = sphi 0, %s41
      %s23 = sphi 0, %s37
      %s24 = sphi 0, %s33
      %s25 = sphi 0, %s22
      %s26 = sphi 0, %s23
      %s27 = sphi 0, %s24
      %s28 = sphi 0, %s25
      %s29 = sphi 0, %s26
      %s30 = sphi 0, %s27
      %s48 = sphi 0, %s50
      %s51 = sphi 0, %s48
      %s52 = sphi 0, %s51
      %s68 = sphi 0, %s52
      %s74 = sphi 0, %s76
      %s77 = sphi 0, %s74
      %s78 = sphi 0, %s77
      %s94 = sphi 0, %s78
      %s100 = sphi 0, %s102
      %s103 = sphi 0, %s100
      %s104 = sphi 0, %s103
      %s120 = sphi 0, %s104
    $region4: #{tpu_custom_call.1} parent=1 // loop_header_branch
      %18 = sbr.rel (%p16) target = $region8
    $region5: #{tpu_custom_call.1} parent=1 // loop_body
      %s20 = ssub.s32 %s15, 1
      %s21 = ssub.s32 %s15, 2
      %s31 = sadd.s32 1, %s24
      %p32 = scmp.ge.s32.totalorder %s31, 1
      %s33 = scalar_select %p32, 0, %s31
      %s34 = sadd.s32 1, %s23
      %s35 = scalar_select %p32, %s34, %s23
      %p36 = scmp.ge.s32.totalorder %s35, 1
      %s37 = scalar_select %p36, 0, %s35
      %s38 = sadd.s32 1, %s22
      %s39 = scalar_select %p36, %s38, %s22
      %p40 = scmp.ge.s32.totalorder %s39, 2
      %s41 = scalar_select %p40, 0, %s39
      %s42 = sadd.s32 %s22, %s23
      %s43 = sadd.s32 %s41, %s37
      %s44 = ssub.s32 %s42, %s43
      %s45 = ssub.s32 %s24, %s33
      %s46 = sor.u32 %s44, %s45
      %p47 = scmp.eq.s32.totalorder %s46, 0
      %s49 = sadd.s32 %s48, 1
      %s50 = scalar_select %p47, %s48, %s49
      %p53 = pneg %p47
      %p54 = scmp.eq.s32.totalorder %s15, 1
      %p55 = por %p53, %p54
      %p56 = scmp.ne.s32.totalorder %s48, %s51
      %p57 = scmp.eq.s32.totalorder %s15, 0
      %p58 = por %p56, %p57
      %p59 = scmp.ne.s32.totalorder %s48, %s51
      %p60 = scmp.eq.s32.totalorder %s20, 1
      %p61 = por %p59, %p60
      %p62 = scmp.ne.s32.totalorder %s51, %s52
      %p63 = scmp.eq.s32.totalorder %s20, 0
      %p64 = por %p62, %p63
      %p65 = scmp.ne.s32.totalorder %s51, %s52
      %p66 = scmp.eq.s32.totalorder %s21, 1
      %p67 = por %p65, %p66
      %p69 = scmp.ne.s32.totalorder %s52, %s68
      %p70 = scmp.eq.s32.totalorder %s21, 0
      %p71 = por %p69, %p70
      %s72 = ssub.s32 %s22, %s41
      %p73 = scmp.eq.s32.totalorder %s72, 0
      %s75 = sadd.s32 %s74, 1
      %s76 = scalar_select %p73, %s74, %s75
      %p79 = pneg %p73
      %p80 = scmp.eq.s32.totalorder %s15, 1
      %p81 = por %p79, %p80
      %p82 = scmp.ne.s32.totalorder %s74, %s77
      %p83 = scmp.eq.s32.totalorder %s15, 0
      %p84 = por %p82, %p83
      %p85 = scmp.ne.s32.totalorder %s74, %s77
      %p86 = scmp.eq.s32.totalorder %s20, 1
      %p87 = por %p85, %p86
      %p88 = scmp.ne.s32.totalorder %s77, %s78
      %p89 = scmp.eq.s32.totalorder %s20, 0
      %p90 = por %p88, %p89
      %p91 = scmp.ne.s32.totalorder %s77, %s78
      %p92 = scmp.eq.s32.totalorder %s21, 1
      %p93 = por %p91, %p92
      %p95 = scmp.ne.s32.totalorder %s78, %s94
      %p96 = scmp.eq.s32.totalorder %s21, 0
      %p97 = por %p95, %p96
      %s98 = ssub.s32 %s22, %s41
      %p99 = scmp.eq.s32.totalorder %s98, 0
      %s101 = sadd.s32 %s100, 1
      %s102 = scalar_select %p99, %s100, %s101
      %p105 = pneg %p99
      %p106 = scmp.eq.s32.totalorder %s15, 1
      %p107 = por %p105, %p106
      %p108 = scmp.ne.s32.totalorder %s100, %s103
      %p109 = scmp.eq.s32.totalorder %s15, 0
      %p110 = por %p108, %p109
      %p111 = scmp.ne.s32.totalorder %s100, %s103
      %p112 = scmp.eq.s32.totalorder %s20, 1
      %p113 = por %p111, %p112
      %p114 = scmp.ne.s32.totalorder %s103, %s104
      %p115 = scmp.eq.s32.totalorder %s20, 0
      %p116 = por %p114, %p115
      %p117 = scmp.ne.s32.totalorder %s103, %s104
      %p118 = scmp.eq.s32.totalorder %s21, 1
      %p119 = por %p117, %p118
      %p121 = scmp.ne.s32.totalorder %s104, %s120
      %p122 = scmp.eq.s32.totalorder %s21, 0
      %p123 = por %p121, %p122
      %p124 = scmp.le.s32.totalorder 1, %s15
      %p125 = scmp.lt.s32.totalorder %s15, 3
      %p126 = pnand %p124, %p125
      %p127 = pneg %p126
      // Predicated region
      $region9: #{tpu_custom_call.1} parent=5 // pred_check
        _
      $region10: #{tpu_custom_call.1} parent=5 // pred_check_branch
        %129 = sbr.rel (%p126) target = $region12
      $region11: #{tpu_custom_call.1} parent=5 // pred_region
        %s130 = ssub.s32 %s15, 1
      $region12: #{tpu_custom_call.1} parent=5 // pred_fallthru
        _
      %p131 = scmp.lt.s32.totalorder %s15, 2
      // Predicated region
      $region13: #{tpu_custom_call.1} parent=5 // pred_check
        %p132 = pneg %p131
      $region14: #{tpu_custom_call.1} parent=5 // pred_check_branch
        %134 = sbr.rel (%p132) target = $region16
      $region15: #{tpu_custom_call.1} parent=5 // pred_region
        // Predicated region
        $region17: #{tpu_custom_call.1} parent=15 // pred_check
          %p135 = pneg %p58
        $region18: #{tpu_custom_call.1} parent=15 // pred_check_branch
          %137 = sbr.rel (%p135) target = $region20
        $region19: #{tpu_custom_call.1} parent=15 // pred_region
          %s138 = sand.u32 %s48, 1
          %s139 = scalar_lea.sflag [#allocation3], %s138
          %s140 = sand.u32 %s48, 1
          %s141 = smul.addr %s140, 8
          %s142 = scalar_lea.vmem [#allocation2], %s141
          %s143 = sadd.s32 %s22, %s23
          %s144 = smul.u32 2, %s24
          %s146 = ssub.s32 128, 128
          %147 = vsyncadd %s139, %s146
          %s148 = smul.addr %s143, 2
          %s149 = sadd.s32 %s144, %s148
          %s150 = smul.addr %s149, 64
          %s151 = scalar_lea.hbm %s0, %s150
          %s153 = sshll.u32 %s142, 4
          %s154 = int_to_ptr.vmem [resolvable:$true] %s153
          %156 = dma.hbm_to_vmem [thread:$0]  %s151, 128, %s154, %s139
        $region20: #{tpu_custom_call.1} parent=15 // pred_fallthru
          _
      $region16: #{tpu_custom_call.1} parent=5 // pred_fallthru
        _
      %p157 = scmp.le.s32.totalorder 1, %s15
      %p158 = scmp.lt.s32.totalorder %s15, 3
      %p159 = pnand %p157, %p158
      %p160 = pneg %p159
      // Predicated region
      $region21: #{tpu_custom_call.1} parent=5 // pred_check
        _
      $region22: #{tpu_custom_call.1} parent=5 // pred_check_branch
        %162 = sbr.rel (%p159) target = $region24
      $region23: #{tpu_custom_call.1} parent=5 // pred_region
        %s163 = ssub.s32 %s15, 1
        %s164 = sand.u32 %s51, 1
        %s165 = scalar_lea.sflag [#allocation3], %s164
        %s166 = sand.u32 %s51, 1
        %s167 = smul.addr %s166, 8
        %s168 = scalar_lea.vmem [#allocation2], %s167
        // Predicated region
        $region25: #{tpu_custom_call.1} parent=23 // pred_check
          %p169 = pneg %p64
        $region26: #{tpu_custom_call.1} parent=23 // pred_check_branch
          %171 = sbr.rel (%p169) target = $region28
        $region27: #{tpu_custom_call.1} parent=23 // pred_region
          %172 = dma.done %s165, 128
        $region28: #{tpu_custom_call.1} parent=23 // pred_fallthru
          _
        %s173 = sand.u32 %s51, 1
        %s174 = scalar_lea.sflag [#allocation3], %s173
        %s175 = sand.u32 %s51, 1
        %s176 = smul.addr %s175, 8
        %s177 = scalar_lea.vmem [#allocation2], %s176
        %p178 = pneg %p64
        %p179 = pneg %p61
        %p180 = pneg %p90
        %p181 = pneg %p87
        %s182 = sand.u32 %s77, 1
        %s183 = scalar_lea.sflag [#allocation4], %s182
        %s184 = sand.u32 %s77, 1
        %s185 = smul.addr %s184, 4
        %s186 = scalar_lea.vmem [#allocation5], %s185
        %p187 = pneg %p116
        %p188 = pneg %p113
        %p189 = scmp.lt.s32.totalorder %s25, 1
        %s190 = scalar_select %p189, %s25, 1
        %s191 = smul.addr %s190, 4
        %s192 = scalar_lea.vmem %s2, %s191
        %s193 = sadd.s32 %s25, %s26
        %s194 = smul.u32 2, %s27
        %p195 = scmp.lt.s32.totalorder %s25, 1
        %s196 = scalar_select %p195, %s25, 1
        %s197 = smul.addr %s196, 4
        %s198 = scalar_lea.vmem %s2, %s197
        %p199 = scmp.eq.s32.totalorder %s26, 0
        %p200 = scmp.eq.s32.totalorder %s27, 0
        %p201 = pnand %p199, %p200
        %p202 = pneg %p201
        // Predicated region
        $region29: #{tpu_custom_call.1} parent=23 // pred_check
          _
        $region30: #{tpu_custom_call.1} parent=23 // pred_check_branch
          %204 = sbr.rel (%p201) target = $region32
        $region31: #{tpu_custom_call.1} parent=23 // pred_region
          %vm205 = vcmask 27648
          %206 = vst.msk [vmem:[%s186] sm:$0xf] %vm205, 0.0
          %vm207 = vcmask 3072
          %208 = vst.msk [vmem:[%s198] sm:$0xf] %vm207, 0.0
        $region32: #{tpu_custom_call.1} parent=23 // pred_fallthru
          _
        %v209 = vld [vmem:[%s168] sm:$0xff]
        %v210 = vld [vmem:[%s186] sm:$0xf]
        %v212 = vcombine.high %v209, %v209
        %214 = vmatprep.subr.mxu0 0.0
        %215 = vmatpush1.xpose.msra.mxu0 0.0
        %216 = vmatprep.subr.mxu0 0.0
        %217 = vmatpush1.xpose.msra.mxu0 0.0
        %218 = vmatprep.subr.mxu0 0.0
        %219 = vmatpush1.xpose.msra.mxu0 0.0
        %220 = vmatprep.subr.mxu0 0.0
        %221 = vmatpush1.xpose.msra.mxu0 0.0
        %222 = vmatprep.subr.mxu0 0.0
        %223 = vmatpush1.xpose.msra.mxu0 0.0
        %224 = vmatprep.subr.mxu0 0.0
        %225 = vmatpush1.xpose.msra.mxu0 0.0
        %226 = vmatprep.subr.mxu0 0.0
        %227 = vmatpush1.xpose.msra.mxu0 0.0
        %228 = vmatprep.subr.mxu0 0.0
        %229 = vmatpush1.xpose.msra.mxu0 0.0
        %230 = vmatprep.subr.mxu0 0.0
        %231 = vmatpush1.xpose.msra.mxu0 0.0
        %232 = vmatprep.subr.mxu0 0.0
        %233 = vmatpush1.xpose.msra.mxu0 0.0
        %234 = vmatprep.subr.mxu0 0.0
        %235 = vmatpush1.xpose.msra.mxu0 0.0
        %236 = vmatprep.subr.mxu0 0.0
        %237 = vmatpush1.xpose.msra.mxu0 0.0
        %238 = vmatprep.subr.mxu0 0.0
        %239 = vmatpush1.xpose.msra.mxu0 0.0
        %240 = vmatprep.subr.mxu0 0.0
        %241 = vmatpush1.xpose.msra.mxu0 0.0
        %242 = vmatprep.subr.mxu0 0.0
        %243 = vmatpush1.xpose.msra.mxu0 0.0
        %244 = vmatprep.subr.mxu0 %v212
        %245 = vmatpush1.xpose.msra.mxu0 %v209
        %246 = vmatprep.subr.mxu0 0.0
        %247 = vmatpush2.xpose.msra.mxu0 0.0
        %248 = vmatprep.subr.mxu0 0.0
        %249 = vmatpush2.xpose.msra.mxu0 0.0
        %250 = vmatprep.subr.mxu0 0.0
        %251 = vmatpush2.xpose.msra.mxu0 0.0
        %252 = vmatprep.subr.mxu0 0.0
        %253 = vmatpush2.xpose.msra.mxu0 0.0
        %254 = vmatprep.subr.mxu0 0.0
        %255 = vmatpush2.xpose.msra.mxu0 0.0
        %256 = vmatprep.subr.mxu0 0.0
        %257 = vmatpush2.xpose.msra.mxu0 0.0
        %258 = vmatprep.subr.mxu0 0.0
        %259 = vmatpush2.xpose.msra.mxu0 0.0
        %260 = vmatprep.subr.mxu0 0.0
        %261 = vmatpush2.xpose.msra.mxu0 0.0
        %262 = vmatprep.subr.mxu0 0.0
        %263 = vmatpush2.xpose.msra.mxu0 0.0
        %264 = vmatprep.subr.mxu0 0.0
        %265 = vmatpush2.xpose.msra.mxu0 0.0
        %266 = vmatprep.subr.mxu0 0.0
        %267 = vmatpush2.xpose.msra.mxu0 0.0
        %268 = vmatprep.subr.mxu0 0.0
        %269 = vmatpush2.xpose.msra.mxu0 0.0
        %270 = vmatprep.subr.mxu0 0.0
        %271 = vmatpush2.xpose.msra.mxu0 0.0
        %272 = vmatprep.subr.mxu0 0.0
        %273 = vmatpush2.xpose.msra.mxu0 0.0
        %274 = vmatprep.subr.mxu0 0.0
        %275 = vmatpush2.xpose.msra.mxu0 0.0
        %276 = vmatprep.subr.mxu0 0.0
        %277 = vmatpush2.xpose.msra.mxu0 0.0
        %278 = vmatprep.mubr.f32.mxu0 %v212
        %279 = vmatmul.mubr.f32.gmra.mxu0 %v209
        %v280 = vpop.f32.mrf.mxu0
        %v281 = vadd.f32 0.0, %v280
        %v282 = vpop.f32.mrf.mxu0
        %283 = vdwg.mxu0
        %v284 = vadd.f32 %v210, %v281
        %vm285 = vcmask 27648
        %286 = vst.msk [vmem:[%s186] sm:$0xf] %vm285, %v284
        %v287 = vld [vmem:[%s198] sm:$0xf]
        %vm288 = vcmask 1043456
        %v289 = vsel %vm288, %v209, 0.0
        %v290 = vsel %vm288, %v212, 0.0
        %v291 = vadd.f32 %v289, %v290
        %292 = vadd.xlane.f32.xlu0 %v291
        %v293 = vpop.xlane.xlu0 %292
        %v294 = vadd.f32 %v287, %v293
        %vm295 = vcmask 3072
        %296 = vst.msk [vmem:[%s198] sm:$0xf] %vm295, %v294
        %s297 = sand.u32 %s77, 1
        %s298 = scalar_lea.sflag [#allocation4], %s297
        %s299 = sand.u32 %s77, 1
        %s300 = smul.addr %s299, 4
        %s301 = scalar_lea.vmem [#allocation5], %s300
        %p302 = scmp.lt.s32.totalorder %s25, 1
        %s303 = scalar_select %p302, %s25, 1
        %s304 = smul.addr %s303, 4
        %s305 = scalar_lea.vmem %s2, %s304
        // Predicated region
        $region33: #{tpu_custom_call.1} parent=23 // pred_check
          %p306 = pneg %p87
        $region34: #{tpu_custom_call.1} parent=23 // pred_check_branch
          %308 = sbr.rel (%p306) target = $region36
        $region35: #{tpu_custom_call.1} parent=23 // pred_region
          %s310 = ssub.s32 64, 64
          %311 = vsyncadd %s298, %s310
          %s312 = smul.addr %s25, 64
          %s313 = scalar_lea.hbm %s1, %s312
          %s315 = sshll.u32 %s301, 4
          %s316 = int_to_ptr.vmem [resolvable:$true] %s315
          %318 = dma.vmem_to_hbm [thread:$0]  %s316, 64, %s313, %s298
        $region36: #{tpu_custom_call.1} parent=23 // pred_fallthru
          _
        // Predicated region
        $region37: #{tpu_custom_call.1} parent=23 // pred_check
          %p319 = pneg %p113
        $region38: #{tpu_custom_call.1} parent=23 // pred_check_branch
          %321 = sbr.rel (%p319) target = $region40
        $region39: #{tpu_custom_call.1} parent=23 // pred_region
          _
        $region40: #{tpu_custom_call.1} parent=23 // pred_fallthru
          _
      $region24: #{tpu_custom_call.1} parent=5 // pred_fallthru
        _
      %p322 = scmp.le.s32.totalorder 2, %s15
      // Predicated region
      $region41: #{tpu_custom_call.1} parent=5 // pred_check
        %p323 = pneg %p322
      $region42: #{tpu_custom_call.1} parent=5 // pred_check_branch
        %325 = sbr.rel (%p323) target = $region44
      $region43: #{tpu_custom_call.1} parent=5 // pred_region
        %s326 = ssub.s32 %s15, 2
        // Predicated region
        $region45: #{tpu_custom_call.1} parent=43 // pred_check
          %p327 = pneg %p93
        $region46: #{tpu_custom_call.1} parent=43 // pred_check_branch
          %329 = sbr.rel (%p327) target = $region48
        $region47: #{tpu_custom_call.1} parent=43 // pred_region
          %s330 = sand.u32 %s78, 1
          %s331 = scalar_lea.sflag [#allocation4], %s330
          %s332 = sand.u32 %s78, 1
          %s333 = smul.addr %s332, 4
          %s334 = scalar_lea.vmem [#allocation5], %s333
          %335 = dma.done %s331, 64
        $region48: #{tpu_custom_call.1} parent=43 // pred_fallthru
          _
        // Predicated region
        $region49: #{tpu_custom_call.1} parent=43 // pred_check
          %p336 = pneg %p119
        $region50: #{tpu_custom_call.1} parent=43 // pred_check_branch
          %338 = sbr.rel (%p336) target = $region52
        $region51: #{tpu_custom_call.1} parent=43 // pred_region
          %p339 = scmp.lt.s32.totalorder %s28, 1
          %s340 = scalar_select %p339, %s28, 1
          %s341 = smul.addr %s340, 4
          %s342 = scalar_lea.vmem %s2, %s341
        $region52: #{tpu_custom_call.1} parent=43 // pred_fallthru
          _
      $region44: #{tpu_custom_call.1} parent=5 // pred_fallthru
        _
    $region6: #{tpu_custom_call.1} parent=1 // loop_footer
      %s19 = sadd.s32 1, %s15
    $region7: #{tpu_custom_call.1} parent=1 // loop_footer_branch
      %14 = sbr.rel target = $region3
    $region8: #{tpu_custom_call.1} parent=1 // loop_exit
      _
    %343 = vsyncpa [#allocation3], 1
    %s344 = scalar_lea.sflag [#allocation3], 1
    %345 = vsyncpa %s344, 1
    %346 = vsyncpa [#allocation4], 1
    %s347 = scalar_lea.sflag [#allocation4], 1
    %348 = vsyncpa %s347, 1

</llo_original>
